<compile_context>
chip_gen: v7x
topology: tpu7x:2x2x1
jax: 0.10.0
libtpu: 0.0.40
codegen_flags: <defaults>
</compile_context>

<pallas_src>
import math
import functools

import jax
import jax.numpy as jnp
from jax.experimental import pallas as pl
from jax.experimental.pallas import tpu as pltpu


def _encoder_kernel(ego_ref, other_ref, mask_ref, wk_ref, wvt_ref, wq_ref, wo_ref,
                    hm_ref, out_ref, *, nhead, d_head, num_layers):
    # Block shapes:
    #   ego_ref  (TB, D)        other_ref (TB, N1, D)   mask_ref (TB, N1)
    #   wk_ref   (D, D)         wvt_ref   (D, D)  (W_v tiled across heads)
    #   wq_ref   (L, D, D)      wo_ref    (L, D, D)
    #   hm_ref   (D, H)  head indicator: hm[i, h] = 1 iff i // d_head == h
    tb, n1, d = other_ref.shape
    scale = 1.0 / math.sqrt(d_head)

    # Encoder-level projections, shared across all layers (batch folded into M).
    other2d = other_ref[...].reshape(tb * n1, d)
    keys = jnp.dot(other2d, wk_ref[...], preferred_element_type=jnp.float32)      # (TB*N1, D)
    value_t = jnp.dot(other2d, wvt_ref[...], preferred_element_type=jnp.float32)  # (TB*N1, D) head-tiled
    keys3 = keys.reshape(tb, n1, d)

    hm = hm_ref[...]                                                              # (D, H)

    # Mask bias hoisted out of the layer loop: additive 0 / -1e9, broadcast over heads.
    bias = jnp.where(mask_ref[...] > 0.0, 0.0, -1e9)[:, :, None]                  # (TB, N1, 1)

    x = ego_ref[...]                                                              # (TB, D)
    for l in range(num_layers):                                                   # static unrolled
        q_all = jnp.dot(x, wq_ref[l], preferred_element_type=jnp.float32)         # (TB, D)

        # Per-head scores for all heads at once:
        #   s[b, n, h] = sum_j q[b, h*dh + j] * keys[b, n, h*dh + j]
        prod = keys3 * q_all[:, None, :]                                           # (TB, N1, D)
        s = jnp.dot(prod.reshape(tb * n1, d), hm,
                    preferred_element_type=jnp.float32).reshape(tb, n1, nhead)
        s = s * scale + bias

        # Softmax over the N1 (social) axis, per batch row and head.
        s = s - jnp.max(s, axis=1, keepdims=True)
        p = jnp.exp(s)
        p = p * pl.reciprocal(jnp.sum(p, axis=1, keepdims=True), approx=True)      # (TB, N1, H)

        # Broadcast per-head probs across that head's dh lanes (p @ E^T via
        # dot_general, no transpose), weight the head-tiled value, reduce over N1.
        p_exp = jax.lax.dot_general(p.reshape(tb * n1, nhead), hm,
                                    dimension_numbers=(((1,), (1,)), ((), ())),
                                    preferred_element_type=jnp.float32)            # (TB*N1, D)
        attn = jnp.sum((p_exp * value_t).reshape(tb, n1, d), axis=1)               # (TB, D)

        x = x + jnp.dot(attn, wo_ref[l], preferred_element_type=jnp.float32)

    out_ref[...] = x


def transformer_encoder(ego, other, mask, wk_cat, wv, wq_cat, wo,
                        *, nhead, d_head, num_layers, batch_tile=128):
    """ego (B,1,D), other (B,N1,D), mask (B,N1) -> (B,1,D)."""
    b, _, d = ego.shape
    n1 = other.shape[1]
    h = nhead

    tb = min(b, batch_tile)
    assert b % tb == 0, "batch must divide the batch tile"

    # Lane-dense 2-D views / precomputed constants (wrapper-side layout plumbing).
    ego2d = ego.reshape(b, d)
    wv_tiled = jnp.tile(wv, (1, h))                      # (D, H*dh): value head-broadcast folded in
    head_mat = (jnp.arange(d)[:, None] // d_head ==
                jnp.arange(h)[None, :]).astype(jnp.float32)   # (D, H)

    kernel = functools.partial(_encoder_kernel, nhead=nhead, d_head=d_head,
                               num_layers=num_layers)

    out2d = pl.pallas_call(
        kernel,
        out_shape=jax.ShapeDtypeStruct((b, d), jnp.float32),
        grid_spec=pltpu.PrefetchScalarGridSpec(
            num_scalar_prefetch=0,
            grid=(b // tb,),
            in_specs=[
                pl.BlockSpec((tb, d), lambda i: (i, 0)),                        # ego (2-D, lane-dense)
                pl.BlockSpec((tb, n1, d), lambda i: (i, 0, 0)),                 # other
                pl.BlockSpec((tb, n1), lambda i: (i, 0)),                       # mask
                pl.BlockSpec((d, h * d_head), lambda i: (0, 0)),                # W_k (heads concat), resident
                pl.BlockSpec((d, h * d_head), lambda i: (0, 0)),                # W_v tiled across heads, resident
                pl.BlockSpec((num_layers, d, h * d_head), lambda i: (0, 0, 0)), # W_q per layer, resident
                pl.BlockSpec((num_layers, d, d), lambda i: (0, 0, 0)),          # W_o per layer, resident
                pl.BlockSpec((d, h), lambda i: (0, 0)),                         # head indicator matrix
            ],
            out_specs=pl.BlockSpec((tb, d), lambda i: (i, 0)),
        ),
        compiler_params=pltpu.CompilerParams(dimension_semantics=("parallel",)),
    )(ego2d, other, mask, wk_cat, wv_tiled, wq_cat, wo, head_mat)

    return out2d.reshape(b, 1, d)


def reference(ego, other, mask, wk_cat, wv, wq_cat, wo, *, nhead, d_head, num_layers):
    """Pure-JAX reference of the same forward semantics (mask: (B, N1))."""
    keys = jnp.einsum('bnd,de->bne', other, wk_cat)
    value = jnp.einsum('bnd,de->bne', other, wv)
    x = ego
    scale = 1.0 / math.sqrt(d_head)
    for l in range(num_layers):
        q_all = jnp.einsum('bqd,de->bqe', x, wq_cat[l])
        outs = []
        for h in range(nhead):
            q = q_all[..., h * d_head:(h + 1) * d_head]
            k = keys[..., h * d_head:(h + 1) * d_head]
            s = jnp.einsum('bqe,bne->bqn', q, k) * scale
            s = jnp.where(mask[:, None, :] > 0, s, -1e9)
            p = jax.nn.softmax(s, axis=-1)
            outs.append(jnp.einsum('bqn,bne->bqe', p, value))
        attn = jnp.concatenate(outs, axis=-1)
        x = x + jnp.einsum('bqd,de->bqe', attn, wo[l])
    return x


if __name__ == "__main__":
    # Small shapes consistent with the module's forward.
    B, N1, D_MODEL, NHEAD, NUM_LAYERS = 2, 8, 32, 4, 2
    D_HEAD = D_MODEL // NHEAD
    stdv = 1.0 / math.sqrt(D_MODEL)

    key = jax.random.PRNGKey(0)
    k_ego, k_oth, k_msk, k_wk, k_wv, k_wq, k_wo = jax.random.split(key, 7)

    ego = jax.random.normal(k_ego, (B, 1, D_MODEL), jnp.float32)
    other = jax.random.normal(k_oth, (B, N1, D_MODEL), jnp.float32)
    mask = (jax.random.uniform(k_msk, (B, N1)) > 0.3).astype(jnp.float32)
    mask = mask.at[:, 0].set(1.0)  # keep at least one valid entry per batch

    # Deterministic parameter init (uniform(-stdv, stdv), matching __init__).
    # W_k: (nhead, d_model, d_head) -> concat over heads -> (d_model, nhead*d_head)
    wk = jax.random.uniform(k_wk, (NHEAD, D_MODEL, D_HEAD), jnp.float32, -stdv, stdv)
    wk_cat = jnp.transpose(wk, (1, 0, 2)).reshape(D_MODEL, NHEAD * D_HEAD)
    wv = jax.random.uniform(k_wv, (D_MODEL, D_HEAD), jnp.float32, -stdv, stdv)
    # Per-layer weights for the assumed encoder layer.
    wq = jax.random.uniform(k_wq, (NUM_LAYERS, NHEAD, D_MODEL, D_HEAD), jnp.float32, -stdv, stdv)
    wq_cat = jnp.transpose(wq, (0, 2, 1, 3)).reshape(NUM_LAYERS, D_MODEL, NHEAD * D_HEAD)
    wo = jax.random.uniform(k_wo, (NUM_LAYERS, D_MODEL, D_MODEL), jnp.float32, -stdv, stdv)

    out = transformer_encoder(ego, other, mask, wk_cat, wv, wq_cat, wo,
                              nhead=NHEAD, d_head=D_HEAD, num_layers=NUM_LAYERS)
    out = jax.block_until_ready(out)

    ref = reference(ego, other, mask, wk_cat, wv, wq_cat, wo,
                    nhead=NHEAD, d_head=D_HEAD, num_layers=NUM_LAYERS)
    assert out.shape == (B, 1, D_MODEL)
    # Tolerance accounts for the EUP approximate-reciprocal softmax normalization.
    assert jnp.allclose(out, ref, atol=2e-3, rtol=2e-3), "mismatch vs JAX reference"
    print("KERNEL_OK")
</pallas_src>

<mosaic_0001>
module attributes {stable_mosaic.version = 11 : i64} {
  func.func @_encoder_kernel(%arg0: i32, %arg1: memref<2x32xf32, #tpu.memory_space<vmem>>, %arg2: memref<2x8x32xf32, #tpu.memory_space<vmem>>, %arg3: memref<2x8xf32, #tpu.memory_space<vmem>>, %arg4: memref<32x32xf32, #tpu.memory_space<vmem>>, %arg5: memref<32x32xf32, #tpu.memory_space<vmem>>, %arg6: memref<2x32x32xf32, #tpu.memory_space<vmem>>, %arg7: memref<2x32x32xf32, #tpu.memory_space<vmem>>, %arg8: memref<32x4xf32, #tpu.memory_space<vmem>>, %arg9: memref<2x32xf32, #tpu.memory_space<vmem>>) attributes {dimension_semantics = [#tpu.dimension_semantics<parallel>], iteration_bounds = array<i64: 1>, scalar_prefetch = 0 : i64, scratch_operands = 0 : i64, tpu.core_type = #tpu.core_type<tc>, window_params = [{transform_indices = @transform_0, window_bounds = array<i64: 2, 32>}, {transform_indices = @transform_1, window_bounds = array<i64: 2, 8, 32>}, {transform_indices = @transform_2, window_bounds = array<i64: 2, 8>}, {pipeline_mode = #tpu.pipeline_mode<synchronous>, transform_indices = @transform_3, window_bounds = array<i64: 32, 32>}, {pipeline_mode = #tpu.pipeline_mode<synchronous>, transform_indices = @transform_4, window_bounds = array<i64: 32, 32>}, {pipeline_mode = #tpu.pipeline_mode<synchronous>, transform_indices = @transform_5, window_bounds = array<i64: 2, 32, 32>}, {pipeline_mode = #tpu.pipeline_mode<synchronous>, transform_indices = @transform_6, window_bounds = array<i64: 2, 32, 32>}, {pipeline_mode = #tpu.pipeline_mode<synchronous>, transform_indices = @transform_7, window_bounds = array<i64: 32, 4>}, {transform_indices = @transform_8, window_bounds = array<i64: 2, 32>}]} {
    %c0 = arith.constant 0 : index
    %c0_0 = arith.constant 0 : index
    %c0_1 = arith.constant 0 : index
    %0 = vector.load %arg2[%c0, %c0_0, %c0_1] : memref<2x8x32xf32, #tpu.memory_space<vmem>>, vector<2x8x32xf32>
    %1 = vector.shape_cast %0 : vector<2x8x32xf32> to vector<16x32xf32>
    %c0_2 = arith.constant 0 : index
    %c0_3 = arith.constant 0 : index
    %2 = vector.load %arg4[%c0_2, %c0_3] : memref<32x32xf32, #tpu.memory_space<vmem>>, vector<32x32xf32>
    %cst = arith.constant dense<0.000000e+00> : vector<16x32xf32>
    %3 = tpu.matmul %1, %2, %cst {dimension_numbers = #tpu.dot_dimension_numbers<[1], [0], [0], [1], [0, 0, 1, 1], [], []>} : vector<16x32xf32>, vector<32x32xf32>, vector<16x32xf32> -> vector<16x32xf32>
    %c0_4 = arith.constant 0 : index
    %c0_5 = arith.constant 0 : index
    %4 = vector.load %arg5[%c0_4, %c0_5] : memref<32x32xf32, #tpu.memory_space<vmem>>, vector<32x32xf32>
    %cst_6 = arith.constant dense<0.000000e+00> : vector<16x32xf32>
    %5 = tpu.matmul %1, %4, %cst_6 {dimension_numbers = #tpu.dot_dimension_numbers<[1], [0], [0], [1], [0, 0, 1, 1], [], []>} : vector<16x32xf32>, vector<32x32xf32>, vector<16x32xf32> -> vector<16x32xf32>
    %6 = vector.shape_cast %3 : vector<16x32xf32> to vector<2x8x32xf32>
    %c0_7 = arith.constant 0 : index
    %c0_8 = arith.constant 0 : index
    %7 = vector.load %arg8[%c0_7, %c0_8] : memref<32x4xf32, #tpu.memory_space<vmem>>, vector<32x4xf32>
    %c0_9 = arith.constant 0 : index
    %c0_10 = arith.constant 0 : index
    %8 = vector.load %arg3[%c0_9, %c0_10] : memref<2x8xf32, #tpu.memory_space<vmem>>, vector<2x8xf32>
    %cst_11 = arith.constant 0.000000e+00 : f32
    %9 = vector.broadcast %cst_11 : f32 to vector<2x8xf32>
    %10 = arith.cmpf ogt, %8, %9 : vector<2x8xf32>
    %cst_12 = arith.constant 0.000000e+00 : f32
    %cst_13 = arith.constant -1.000000e+09 : f32
    %11 = vector.broadcast %cst_12 : f32 to vector<2x8xf32>
    %12 = vector.broadcast %cst_13 : f32 to vector<2x8xf32>
    %13 = arith.select %10, %11, %12 : vector<2x8xi1>, vector<2x8xf32>
    %14 = vector.shape_cast %13 : vector<2x8xf32> to vector<2x8x1xf32>
    %c0_14 = arith.constant 0 : index
    %c0_15 = arith.constant 0 : index
    %15 = vector.load %arg1[%c0_14, %c0_15] : memref<2x32xf32, #tpu.memory_space<vmem>>, vector<2x32xf32>
    %c0_16 = arith.constant 0 : index
    %c0_17 = arith.constant 0 : index
    %c0_18 = arith.constant 0 : index
    %16 = vector.load %arg6[%c0_16, %c0_17, %c0_18] : memref<2x32x32xf32, #tpu.memory_space<vmem>>, vector<1x32x32xf32>
    %17 = vector.shape_cast %16 : vector<1x32x32xf32> to vector<32x32xf32>
    %cst_19 = arith.constant dense<0.000000e+00> : vector<2x32xf32>
    %18 = tpu.matmul %15, %17, %cst_19 {dimension_numbers = #tpu.dot_dimension_numbers<[1], [0], [0], [1], [0, 0, 1, 1], [], []>} : vector<2x32xf32>, vector<32x32xf32>, vector<2x32xf32> -> vector<2x32xf32>
    %19 = vector.shape_cast %18 : vector<2x32xf32> to vector<2x1x32xf32>
    %20 = vector.broadcast %19 : vector<2x1x32xf32> to vector<2x8x32xf32>
    %21 = arith.mulf %6, %20 : vector<2x8x32xf32>
    %22 = vector.shape_cast %21 : vector<2x8x32xf32> to vector<16x32xf32>
    %cst_20 = arith.constant dense<0.000000e+00> : vector<16x4xf32>
    %23 = tpu.matmul %22, %7, %cst_20 {dimension_numbers = #tpu.dot_dimension_numbers<[1], [0], [0], [1], [0, 0, 1, 1], [], []>} : vector<16x32xf32>, vector<32x4xf32>, vector<16x4xf32> -> vector<16x4xf32>
    %24 = vector.shape_cast %23 : vector<16x4xf32> to vector<2x8x4xf32>
    %cst_21 = arith.constant 0.353553385 : f32
    %25 = vector.broadcast %cst_21 : f32 to vector<2x8x4xf32>
    %26 = arith.mulf %24, %25 : vector<2x8x4xf32>
    %27 = vector.broadcast %14 : vector<2x8x1xf32> to vector<2x8x4xf32>
    %28 = arith.addf %26, %27 : vector<2x8x4xf32>
    %cst_22 = arith.constant dense<0xFF800000> : vector<2x4xf32>
    %29 = vector.multi_reduction <maximumf>, %28, %cst_22 [1] : vector<2x8x4xf32> to vector<2x4xf32>
    %30 = vector.shape_cast %29 : vector<2x4xf32> to vector<2x1x4xf32>
    %31 = vector.broadcast %30 : vector<2x1x4xf32> to vector<2x8x4xf32>
    %32 = arith.subf %28, %31 : vector<2x8x4xf32>
    %33 = math.exp %32 : vector<2x8x4xf32>
    %cst_23 = arith.constant dense<0.000000e+00> : vector<2x4xf32>
    %34 = vector.multi_reduction <add>, %33, %cst_23 [1] : vector<2x8x4xf32> to vector<2x4xf32>
    %35 = vector.shape_cast %34 : vector<2x4xf32> to vector<2x1x4xf32>
    %36 = tpu.reciprocal %35 {approx = true} : vector<2x1x4xf32> -> vector<2x1x4xf32>
    %37 = vector.broadcast %36 : vector<2x1x4xf32> to vector<2x8x4xf32>
    %38 = arith.mulf %33, %37 : vector<2x8x4xf32>
    %39 = vector.shape_cast %38 : vector<2x8x4xf32> to vector<16x4xf32>
    %cst_24 = arith.constant dense<0.000000e+00> : vector<16x32xf32>
    %40 = tpu.matmul %39, %7, %cst_24 {dimension_numbers = #tpu.dot_dimension_numbers<[1], [1], [0], [0], [0, 0, 1, 0], [], []>} : vector<16x4xf32>, vector<32x4xf32>, vector<16x32xf32> -> vector<16x32xf32>
    %41 = arith.mulf %40, %5 : vector<16x32xf32>
    %42 = vector.shape_cast %41 : vector<16x32xf32> to vector<2x8x32xf32>
    %cst_25 = arith.constant dense<0.000000e+00> : vector<2x32xf32>
    %43 = vector.multi_reduction <add>, %42, %cst_25 [1] : vector<2x8x32xf32> to vector<2x32xf32>
    %c0_26 = arith.constant 0 : index
    %c0_27 = arith.constant 0 : index
    %c0_28 = arith.constant 0 : index
    %44 = vector.load %arg7[%c0_26, %c0_27, %c0_28] : memref<2x32x32xf32, #tpu.memory_space<vmem>>, vector<1x32x32xf32>
    %45 = vector.shape_cast %44 : vector<1x32x32xf32> to vector<32x32xf32>
    %cst_29 = arith.constant dense<0.000000e+00> : vector<2x32xf32>
    %46 = tpu.matmul %43, %45, %cst_29 {dimension_numbers = #tpu.dot_dimension_numbers<[1], [0], [0], [1], [0, 0, 1, 1], [], []>} : vector<2x32xf32>, vector<32x32xf32>, vector<2x32xf32> -> vector<2x32xf32>
    %47 = arith.addf %15, %46 : vector<2x32xf32>
    %c1 = arith.constant 1 : index
    %c0_30 = arith.constant 0 : index
    %c0_31 = arith.constant 0 : index
    %48 = vector.load %arg6[%c1, %c0_30, %c0_31] : memref<2x32x32xf32, #tpu.memory_space<vmem>>, vector<1x32x32xf32>
    %49 = vector.shape_cast %48 : vector<1x32x32xf32> to vector<32x32xf32>
    %cst_32 = arith.constant dense<0.000000e+00> : vector<2x32xf32>
    %50 = tpu.matmul %47, %49, %cst_32 {dimension_numbers = #tpu.dot_dimension_numbers<[1], [0], [0], [1], [0, 0, 1, 1], [], []>} : vector<2x32xf32>, vector<32x32xf32>, vector<2x32xf32> -> vector<2x32xf32>
    %51 = vector.shape_cast %50 : vector<2x32xf32> to vector<2x1x32xf32>
    %52 = vector.broadcast %51 : vector<2x1x32xf32> to vector<2x8x32xf32>
    %53 = arith.mulf %6, %52 : vector<2x8x32xf32>
    %54 = vector.shape_cast %53 : vector<2x8x32xf32> to vector<16x32xf32>
    %cst_33 = arith.constant dense<0.000000e+00> : vector<16x4xf32>
    %55 = tpu.matmul %54, %7, %cst_33 {dimension_numbers = #tpu.dot_dimension_numbers<[1], [0], [0], [1], [0, 0, 1, 1], [], []>} : vector<16x32xf32>, vector<32x4xf32>, vector<16x4xf32> -> vector<16x4xf32>
    %56 = vector.shape_cast %55 : vector<16x4xf32> to vector<2x8x4xf32>
    %cst_34 = arith.constant 0.353553385 : f32
    %57 = vector.broadcast %cst_34 : f32 to vector<2x8x4xf32>
    %58 = arith.mulf %56, %57 : vector<2x8x4xf32>
    %59 = vector.broadcast %14 : vector<2x8x1xf32> to vector<2x8x4xf32>
    %60 = arith.addf %58, %59 : vector<2x8x4xf32>
    %cst_35 = arith.constant dense<0xFF800000> : vector<2x4xf32>
    %61 = vector.multi_reduction <maximumf>, %60, %cst_35 [1] : vector<2x8x4xf32> to vector<2x4xf32>
    %62 = vector.shape_cast %61 : vector<2x4xf32> to vector<2x1x4xf32>
    %63 = vector.broadcast %62 : vector<2x1x4xf32> to vector<2x8x4xf32>
    %64 = arith.subf %60, %63 : vector<2x8x4xf32>
    %65 = math.exp %64 : vector<2x8x4xf32>
    %cst_36 = arith.constant dense<0.000000e+00> : vector<2x4xf32>
    %66 = vector.multi_reduction <add>, %65, %cst_36 [1] : vector<2x8x4xf32> to vector<2x4xf32>
    %67 = vector.shape_cast %66 : vector<2x4xf32> to vector<2x1x4xf32>
    %68 = tpu.reciprocal %67 {approx = true} : vector<2x1x4xf32> -> vector<2x1x4xf32>
    %69 = vector.broadcast %68 : vector<2x1x4xf32> to vector<2x8x4xf32>
    %70 = arith.mulf %65, %69 : vector<2x8x4xf32>
    %71 = vector.shape_cast %70 : vector<2x8x4xf32> to vector<16x4xf32>
    %cst_37 = arith.constant dense<0.000000e+00> : vector<16x32xf32>
    %72 = tpu.matmul %71, %7, %cst_37 {dimension_numbers = #tpu.dot_dimension_numbers<[1], [1], [0], [0], [0, 0, 1, 0], [], []>} : vector<16x4xf32>, vector<32x4xf32>, vector<16x32xf32> -> vector<16x32xf32>
    %73 = arith.mulf %72, %5 : vector<16x32xf32>
    %74 = vector.shape_cast %73 : vector<16x32xf32> to vector<2x8x32xf32>
    %cst_38 = arith.constant dense<0.000000e+00> : vector<2x32xf32>
    %75 = vector.multi_reduction <add>, %74, %cst_38 [1] : vector<2x8x32xf32> to vector<2x32xf32>
    %c1_39 = arith.constant 1 : index
    %c0_40 = arith.constant 0 : index
    %c0_41 = arith.constant 0 : index
    %76 = vector.load %arg7[%c1_39, %c0_40, %c0_41] : memref<2x32x32xf32, #tpu.memory_space<vmem>>, vector<1x32x32xf32>
    %77 = vector.shape_cast %76 : vector<1x32x32xf32> to vector<32x32xf32>
    %cst_42 = arith.constant dense<0.000000e+00> : vector<2x32xf32>
    %78 = tpu.matmul %75, %77, %cst_42 {dimension_numbers = #tpu.dot_dimension_numbers<[1], [0], [0], [1], [0, 0, 1, 1], [], []>} : vector<2x32xf32>, vector<32x32xf32>, vector<2x32xf32> -> vector<2x32xf32>
    %79 = arith.addf %47, %78 : vector<2x32xf32>
    %c0_43 = arith.constant 0 : index
    %c0_44 = arith.constant 0 : index
    %80 = vector.load %arg9[%c0_43, %c0_44] : memref<2x32xf32, #tpu.memory_space<vmem>>, vector<2x32xf32>
    tpu.vector_store %arg9[%c0_43, %c0_44], %79 {strides = array<i32>} : memref<2x32xf32, #tpu.memory_space<vmem>>, vector<2x32xf32>,
    return
  }
  func.func @transform_0(%arg0: i32) -> (i32, i32) {
    %c0_i32 = arith.constant 0 : i32
    %c0_i32_0 = arith.constant 0 : i32
    return %arg0, %c0_i32 : i32, i32
  }
  func.func @transform_1(%arg0: i32) -> (i32, i32, i32) {
    %c0_i32 = arith.constant 0 : i32
    %c0_i32_0 = arith.constant 0 : i32
    %c0_i32_1 = arith.constant 0 : i32
    return %arg0, %c0_i32, %c0_i32_0 : i32, i32, i32
  }
  func.func @transform_2(%arg0: i32) -> (i32, i32) {
    %c0_i32 = arith.constant 0 : i32
    %c0_i32_0 = arith.constant 0 : i32
    return %arg0, %c0_i32 : i32, i32
  }
  func.func @transform_3(%arg0: i32) -> (i32, i32) {
    %c0_i32 = arith.constant 0 : i32
    %c0_i32_0 = arith.constant 0 : i32
    %c0_i32_1 = arith.constant 0 : i32
    return %c0_i32, %c0_i32_0 : i32, i32
  }
  func.func @transform_4(%arg0: i32) -> (i32, i32) {
    %c0_i32 = arith.constant 0 : i32
    %c0_i32_0 = arith.constant 0 : i32
    %c0_i32_1 = arith.constant 0 : i32
    return %c0_i32, %c0_i32_0 : i32, i32
  }
  func.func @transform_5(%arg0: i32) -> (i32, i32, i32) {
    %c0_i32 = arith.constant 0 : i32
    %c0_i32_0 = arith.constant 0 : i32
    %c0_i32_1 = arith.constant 0 : i32
    %c0_i32_2 = arith.constant 0 : i32
    return %c0_i32, %c0_i32_0, %c0_i32_1 : i32, i32, i32
  }
  func.func @transform_6(%arg0: i32) -> (i32, i32, i32) {
    %c0_i32 = arith.constant 0 : i32
    %c0_i32_0 = arith.constant 0 : i32
    %c0_i32_1 = arith.constant 0 : i32
    %c0_i32_2 = arith.constant 0 : i32
    return %c0_i32, %c0_i32_0, %c0_i32_1 : i32, i32, i32
  }
  func.func @transform_7(%arg0: i32) -> (i32, i32) {
    %c0_i32 = arith.constant 0 : i32
    %c0_i32_0 = arith.constant 0 : i32
    %c0_i32_1 = arith.constant 0 : i32
    return %c0_i32, %c0_i32_0 : i32, i32
  }
  func.func @transform_8(%arg0: i32) -> (i32, i32) {
    %c0_i32 = arith.constant 0 : i32
    %c0_i32_0 = arith.constant 0 : i32
    return %arg0, %c0_i32 : i32, i32
  }
}

</mosaic_0001>

<llo_original>
// kernel: tpu_custom_call.1
$region0: #{tpu_custom_call.1}
  #allocation0 [shape = 'u32[]', space=smem, size = 0x4, offset = 0x4, fixed_abs, tag = 'smem constant byte address 0x4 - core index']
  #allocation1 [shape = 'u32[144,128]{1,0:T(1,128)}', space=vmem, size = 0x12000, scoped, tag = 'internal scratch']
  %s0 = inlined_call_operand.vmem [shape: f32[2,32], index: 0, kind: input, shape index: {}]
  %s1 = inlined_call_operand.hbm [shape: f32[2,8,32], index: 1, kind: input, shape index: {}]
  %s2 = inlined_call_operand.vmem [shape: f32[2,8], index: 2, kind: input, shape index: {}]
  %s3 = inlined_call_operand.vmem [shape: f32[32,32], index: 3, kind: input, shape index: {}]
  %s4 = inlined_call_operand.hbm [shape: f32[32,32], index: 4, kind: input, shape index: {}]
  %s5 = inlined_call_operand.hbm [shape: f32[2,32,32], index: 5, kind: input, shape index: {}]
  %s6 = inlined_call_operand.hbm [shape: f32[2,32,32], index: 6, kind: input, shape index: {}]
  %s7 = inlined_call_operand.vmem [shape: f32[32,4], index: 7, kind: input, shape index: {}]
  %s8 = inlined_call_operand.hbm [shape: f32[2,32], index: 8, kind: output, shape index: {}]
  %s9 = sld [smem:[#allocation0]]
  $region58: #{tpu_custom_call.1} parent=0
    _
  %s11 = ssub.s32 1, %s9
  %s12 = scalar_select 0, %s11, %s9
  $region1: #{tpu_custom_call.1} parent=0
    #allocation2 [shape = 'u8[8192]{0}', space=vmem, size = 0x2000, scoped, tag = 'input window, operand 1, single buffered']
    #allocation3 [shape = 's32[1]{0}', space=sflag, size = 0x4, scoped, tag = 'scoped memory for tpu_custom_call.1']
    #allocation4 [shape = 's32[1]{0}', space=sflag, size = 0x4, scoped, tag = 'scoped memory for tpu_custom_call.1']
    #allocation5 [shape = 'u8[16384]{0}', space=vmem, size = 0x4000, scoped, tag = 'input window, operand 4, single buffered']
    #allocation6 [shape = 's32[1]{0}', space=sflag, size = 0x4, scoped, tag = 'scoped memory for tpu_custom_call.1']
    #allocation7 [shape = 'u8[32768]{0}', space=vmem, size = 0x8000, scoped, tag = 'input window, operand 5, single buffered']
    #allocation8 [shape = 'u8[32768]{0}', space=vmem, size = 0x8000, scoped, tag = 'input window, operand 6, single buffered']
    #allocation9 [shape = 's32[1]{0}', space=sflag, size = 0x4, scoped, tag = 'scoped memory for tpu_custom_call.1']
    #allocation10 [shape = 'u8[1024]{0}', space=vmem, size = 0x400, scoped, tag = 'output window, operand 0, single buffered']
    %13 = vsyncpa [#allocation3], 0
    %14 = vsyncpa [#allocation6], 0
    %15 = vsyncpa [#allocation9], 0
    %16 = vsyncpa [#allocation4], 0
    // Predicated region
    $region2: #{tpu_custom_call.1} parent=1 // pred_check
      _
    $region3: #{tpu_custom_call.1} parent=1 // pred_check_branch
      %18 = sbr.rel (0) target = $region5
    $region4: #{tpu_custom_call.1} parent=1 // pred_region
      _
    $region5: #{tpu_custom_call.1} parent=1 // pred_fallthru
      _
    // Predicated region
    $region6: #{tpu_custom_call.1} parent=1 // pred_check
      _
    $region7: #{tpu_custom_call.1} parent=1 // pred_check_branch
      %20 = sbr.rel (0) target = $region9
    $region8: #{tpu_custom_call.1} parent=1 // pred_region
      %s22 = ssub.s32 256, 256
      %23 = vsyncadd [#allocation3], %s22
      %s24 = sshll.u32 [#allocation2], 4
      %s25 = int_to_ptr.vmem [resolvable:$true] %s24
      %30 = dma.hbm_to_vmem [thread:$0]  %s1, 256, %s25, [#allocation3], 128, 128, 8
    $region9: #{tpu_custom_call.1} parent=1 // pred_fallthru
      _
    // Predicated region
    $region10: #{tpu_custom_call.1} parent=1 // pred_check
      _
    $region11: #{tpu_custom_call.1} parent=1 // pred_check_branch
      %32 = sbr.rel (0) target = $region13
    $region12: #{tpu_custom_call.1} parent=1 // pred_region
      _
    $region13: #{tpu_custom_call.1} parent=1 // pred_fallthru
      _
    // Predicated region
    $region14: #{tpu_custom_call.1} parent=1 // pred_check
      _
    $region15: #{tpu_custom_call.1} parent=1 // pred_check_branch
      %34 = sbr.rel (0) target = $region17
    $region16: #{tpu_custom_call.1} parent=1 // pred_region
      _
    $region17: #{tpu_custom_call.1} parent=1 // pred_fallthru
      _
    // Predicated region
    $region18: #{tpu_custom_call.1} parent=1 // pred_check
      _
    $region19: #{tpu_custom_call.1} parent=1 // pred_check_branch
      %36 = sbr.rel (0) target = $region21
    $region20: #{tpu_custom_call.1} parent=1 // pred_region
      %s38 = ssub.s32 512, 512
      %39 = vsyncadd [#allocation6], %s38
      %s40 = sshll.u32 [#allocation5], 4
      %s41 = int_to_ptr.vmem [resolvable:$true] %s40
      %46 = dma.hbm_to_vmem [thread:$0]  %s4, 512, %s41, [#allocation6], 128, 128, 8
    $region21: #{tpu_custom_call.1} parent=1 // pred_fallthru
      _
    // Predicated region
    $region22: #{tpu_custom_call.1} parent=1 // pred_check
      _
    $region23: #{tpu_custom_call.1} parent=1 // pred_check_branch
      %48 = sbr.rel (0) target = $region25
    $region24: #{tpu_custom_call.1} parent=1 // pred_region
      %s50 = ssub.s32 1024, 1024
      %51 = vsyncadd [#allocation6], %s50
      %s52 = sshll.u32 [#allocation7], 4
      %s53 = int_to_ptr.vmem [resolvable:$true] %s52
      %58 = dma.hbm_to_vmem [thread:$0]  %s5, 1024, %s53, [#allocation6], 128, 128, 8
    $region25: #{tpu_custom_call.1} parent=1 // pred_fallthru
      _
    // Predicated region
    $region26: #{tpu_custom_call.1} parent=1 // pred_check
      _
    $region27: #{tpu_custom_call.1} parent=1 // pred_check_branch
      %60 = sbr.rel (0) target = $region29
    $region28: #{tpu_custom_call.1} parent=1 // pred_region
      %s62 = ssub.s32 1024, 1024
      %63 = vsyncadd [#allocation9], %s62
      %s64 = sshll.u32 [#allocation8], 4
      %s65 = int_to_ptr.vmem [resolvable:$true] %s64
      %70 = dma.hbm_to_vmem [thread:$0]  %s6, 1024, %s65, [#allocation9], 128, 128, 8
    $region29: #{tpu_custom_call.1} parent=1 // pred_fallthru
      _
    // Predicated region
    $region30: #{tpu_custom_call.1} parent=1 // pred_check
      _
    $region31: #{tpu_custom_call.1} parent=1 // pred_check_branch
      %72 = sbr.rel (0) target = $region33
    $region32: #{tpu_custom_call.1} parent=1 // pred_region
      _
    $region33: #{tpu_custom_call.1} parent=1 // pred_fallthru
      _
    // Predicated region
    $region34: #{tpu_custom_call.1} parent=1 // pred_check
      _
    $region35: #{tpu_custom_call.1} parent=1 // pred_check_branch
      %74 = sbr.rel (0) target = $region37
    $region36: #{tpu_custom_call.1} parent=1 // pred_region
      %75 = dma.done [#allocation3], 256
    $region37: #{tpu_custom_call.1} parent=1 // pred_fallthru
      _
    // Predicated region
    $region38: #{tpu_custom_call.1} parent=1 // pred_check
      _
    $region39: #{tpu_custom_call.1} parent=1 // pred_check_branch
      %77 = sbr.rel (0) target = $region41
    $region40: #{tpu_custom_call.1} parent=1 // pred_region
      %78 = dma.done [#allocation6], 512
    $region41: #{tpu_custom_call.1} parent=1 // pred_fallthru
      _
    // Predicated region
    $region42: #{tpu_custom_call.1} parent=1 // pred_check
      _
    $region43: #{tpu_custom_call.1} parent=1 // pred_check_branch
      %80 = sbr.rel (0) target = $region45
    $region44: #{tpu_custom_call.1} parent=1 // pred_region
      %81 = dma.done [#allocation6], 1024
    $region45: #{tpu_custom_call.1} parent=1 // pred_fallthru
      _
    // Predicated region
    $region46: #{tpu_custom_call.1} parent=1 // pred_check
      _
    $region47: #{tpu_custom_call.1} parent=1 // pred_check_branch
      %83 = sbr.rel (0) target = $region49
    $region48: #{tpu_custom_call.1} parent=1 // pred_region
      %84 = dma.done [#allocation9], 1024
    $region49: #{tpu_custom_call.1} parent=1 // pred_fallthru
      _
    %v85 = vld [vmem:[#allocation2] sm:$0xff]
    %v86 = vld [vmem:[#allocation2 + $0x8] sm:$0xff]
    %v87 = vld [vmem:[%s3] sm:$0xff]
    %v88 = vld [vmem:[%s3 + $0x8] sm:$0xff]
    %v89 = vld [vmem:[%s3 + $0x10] sm:$0xff]
    %v90 = vld [vmem:[%s3 + $0x18] sm:$0xff]
    %vm91 = vcmask 261120
    %v93 = vsel %vm91, %v85, 0
    %v96 = vsel %vm91, %v86, 0
    %98 = vmatprep.subr.mxu0 0.0
    %99 = vmatpush1.msra.mxu0 %v87
    %100 = vmatprep.subr.mxu0 0.0
    %101 = vmatpush1.msra.mxu0 %v88
    %102 = vmatprep.subr.mxu0 0.0
    %103 = vmatpush1.msra.mxu0 %v89
    %104 = vmatprep.subr.mxu0 0.0
    %105 = vmatpush1.msra.mxu0 %v90
    %106 = vmatprep.subr.mxu0 0.0
    %107 = vmatpush1.msra.mxu0 0.0
    %108 = vmatprep.subr.mxu0 0.0
    %109 = vmatpush1.msra.mxu0 0.0
    %110 = vmatprep.subr.mxu0 0.0
    %111 = vmatpush1.msra.mxu0 0.0
    %112 = vmatprep.subr.mxu0 0.0
    %113 = vmatpush1.msra.mxu0 0.0
    %114 = vmatprep.subr.mxu0 0.0
    %115 = vmatpush1.msra.mxu0 0.0
    %116 = vmatprep.subr.mxu0 0.0
    %117 = vmatpush1.msra.mxu0 0.0
    %118 = vmatprep.subr.mxu0 0.0
    %119 = vmatpush1.msra.mxu0 0.0
    %120 = vmatprep.subr.mxu0 0.0
    %121 = vmatpush1.msra.mxu0 0.0
    %122 = vmatprep.subr.mxu0 0.0
    %123 = vmatpush1.msra.mxu0 0.0
    %124 = vmatprep.subr.mxu0 0.0
    %125 = vmatpush1.msra.mxu0 0.0
    %126 = vmatprep.subr.mxu0 0.0
    %127 = vmatpush1.msra.mxu0 0.0
    %128 = vmatprep.subr.mxu0 0.0
    %129 = vmatpush1.msra.mxu0 0.0
    %130 = vmatprep.subr.mxu0 0.0
    %131 = vmatpush1.msra.mxu0 0.0
    %132 = vmatprep.subr.mxu0 0.0
    %133 = vmatpush1.msra.mxu0 0.0
    %134 = vmatprep.subr.mxu0 0.0
    %135 = vmatpush1.msra.mxu0 0.0
    %136 = vmatprep.subr.mxu0 0.0
    %137 = vmatpush1.msra.mxu0 0.0
    %138 = vmatprep.subr.mxu0 0.0
    %139 = vmatpush1.msra.mxu0 0.0
    %140 = vmatprep.subr.mxu0 0.0
    %141 = vmatpush1.msra.mxu0 0.0
    %142 = vmatprep.subr.mxu0 0.0
    %143 = vmatpush1.msra.mxu0 0.0
    %144 = vmatprep.subr.mxu0 0.0
    %145 = vmatpush1.msra.mxu0 0.0
    %146 = vmatprep.subr.mxu0 0.0
    %147 = vmatpush1.msra.mxu0 0.0
    %148 = vmatprep.subr.mxu0 0.0
    %149 = vmatpush1.msra.mxu0 0.0
    %150 = vmatprep.subr.mxu0 0.0
    %151 = vmatpush1.msra.mxu0 0.0
    %152 = vmatprep.subr.mxu0 0.0
    %153 = vmatpush1.msra.mxu0 0.0
    %154 = vmatprep.subr.mxu0 0.0
    %155 = vmatpush1.msra.mxu0 0.0
    %156 = vmatprep.subr.mxu0 0.0
    %157 = vmatpush1.msra.mxu0 0.0
    %158 = vmatprep.subr.mxu0 0.0
    %159 = vmatpush1.msra.mxu0 0.0
    %160 = vmatprep.subr.mxu0 0.0
    %161 = vmatpush1.msra.mxu0 0.0
    %162 = vmatprep.mubr.f32.mxu0 0.0
    %163 = vmatmul.mubr.f32.gmra.mrb[0].mxu0 %v93
    %v164 = vpop.f32.mrb[0].mxu0
    %v165 = vadd.f32 0.0, %v164
    %v166 = vpop.f32.mrb[0].mxu0
    %167 = vmatprep.mubr.f32.mxu0 0.0
    %168 = vmatmul.mubr.f32.gmra.mrb[0].mxu0 %v96
    %v169 = vpop.f32.mrb[0].mxu0
    %v170 = vadd.f32 0.0, %v169
    %v171 = vpop.f32.mrb[0].mxu0
    %172 = vdwg.mxu0
    %v173 = vld [vmem:[#allocation5] sm:$0xff]
    %v174 = vld [vmem:[#allocation5 + $0x8] sm:$0xff]
    %v175 = vld [vmem:[#allocation5 + $0x10] sm:$0xff]
    %v176 = vld [vmem:[#allocation5 + $0x18] sm:$0xff]
    %177 = vmatprep.subr.mxu0 0.0
    %178 = vmatpush1.msra.mxu0 %v173
    %179 = vmatprep.subr.mxu0 0.0
    %180 = vmatpush1.msra.mxu0 %v174
    %181 = vmatprep.subr.mxu0 0.0
    %182 = vmatpush1.msra.mxu0 %v175
    %183 = vmatprep.subr.mxu0 0.0
    %184 = vmatpush1.msra.mxu0 %v176
    %185 = vmatprep.subr.mxu0 0.0
    %186 = vmatpush1.msra.mxu0 0.0
    %187 = vmatprep.subr.mxu0 0.0
    %188 = vmatpush1.msra.mxu0 0.0
    %189 = vmatprep.subr.mxu0 0.0
    %190 = vmatpush1.msra.mxu0 0.0
    %191 = vmatprep.subr.mxu0 0.0
    %192 = vmatpush1.msra.mxu0 0.0
    %193 = vmatprep.subr.mxu0 0.0
    %194 = vmatpush1.msra.mxu0 0.0
    %195 = vmatprep.subr.mxu0 0.0
    %196 = vmatpush1.msra.mxu0 0.0
    %197 = vmatprep.subr.mxu0 0.0
    %198 = vmatpush1.msra.mxu0 0.0
    %199 = vmatprep.subr.mxu0 0.0
    %200 = vmatpush1.msra.mxu0 0.0
    %201 = vmatprep.subr.mxu0 0.0
    %202 = vmatpush1.msra.mxu0 0.0
    %203 = vmatprep.subr.mxu0 0.0
    %204 = vmatpush1.msra.mxu0 0.0
    %205 = vmatprep.subr.mxu0 0.0
    %206 = vmatpush1.msra.mxu0 0.0
    %207 = vmatprep.subr.mxu0 0.0
    %208 = vmatpush1.msra.mxu0 0.0
    %209 = vmatprep.subr.mxu0 0.0
    %210 = vmatpush1.msra.mxu0 0.0
    %211 = vmatprep.subr.mxu0 0.0
    %212 = vmatpush1.msra.mxu0 0.0
    %213 = vmatprep.subr.mxu0 0.0
    %214 = vmatpush1.msra.mxu0 0.0
    %215 = vmatprep.subr.mxu0 0.0
    %216 = vmatpush1.msra.mxu0 0.0
    %217 = vmatprep.subr.mxu0 0.0
    %218 = vmatpush1.msra.mxu0 0.0
    %219 = vmatprep.subr.mxu0 0.0
    %220 = vmatpush1.msra.mxu0 0.0
    %221 = vmatprep.subr.mxu0 0.0
    %222 = vmatpush1.msra.mxu0 0.0
    %223 = vmatprep.subr.mxu0 0.0
    %224 = vmatpush1.msra.mxu0 0.0
    %225 = vmatprep.subr.mxu0 0.0
    %226 = vmatpush1.msra.mxu0 0.0
    %227 = vmatprep.subr.mxu0 0.0
    %228 = vmatpush1.msra.mxu0 0.0
    %229 = vmatprep.subr.mxu0 0.0
    %230 = vmatpush1.msra.mxu0 0.0
    %231 = vmatprep.subr.mxu0 0.0
    %232 = vmatpush1.msra.mxu0 0.0
    %233 = vmatprep.subr.mxu0 0.0
    %234 = vmatpush1.msra.mxu0 0.0
    %235 = vmatprep.subr.mxu0 0.0
    %236 = vmatpush1.msra.mxu0 0.0
    %237 = vmatprep.subr.mxu0 0.0
    %238 = vmatpush1.msra.mxu0 0.0
    %239 = vmatprep.subr.mxu0 0.0
    %240 = vmatpush1.msra.mxu0 0.0
    %241 = vmatprep.mubr.f32.mxu0 0.0
    %242 = vmatmul.mubr.f32.gmra.mrb[0].mxu0 %v93
    %v243 = vpop.f32.mrb[0].mxu0
    %v244 = vadd.f32 0.0, %v243
    %v245 = vpop.f32.mrb[0].mxu0
    %246 = vmatprep.mubr.f32.mxu0 0.0
    %247 = vmatmul.mubr.f32.gmra.mrb[0].mxu0 %v96
    %v248 = vpop.f32.mrb[0].mxu0
    %v249 = vadd.f32 0.0, %v248
    %v250 = vpop.f32.mrb[0].mxu0
    %251 = vdwg.mxu0
    %v252 = vld [vmem:[%s7] sm:$0xff]
    %v253 = vld [vmem:[%s7 + $0x8] sm:$0xff]
    %v254 = vld [vmem:[%s7 + $0x10] sm:$0xff]
    %v255 = vld [vmem:[%s7 + $0x18] sm:$0xff]
    %v256 = vld [vmem:[%s2] sm:$0x3]
    %vm257 = vcmp.gt.f32.partialorder %v256, 0.0
    %v258 = vsel %vm257, 0.0, -1e+09
    %v259 = vlaneseq
    %v260 = vshrl.u32 %v259, 7
    %v261 = vsub.s32 0, %v260
    %v262 = vrot.slane %v258, %v261
    %264 = vbcast.lane.b32.xlu0 %v262, 256
    %v265 = vpop.permute.xlu0 %264
    %v266 = vlaneseq
    %v267 = vshrl.u32 %v266, 7
    %v268 = vsub.s32 1, %v267
    %v269 = vrot.slane %v258, %v268
    %271 = vbcast.lane.b32.xlu0 %v269, 256
    %v272 = vpop.permute.xlu0 %271
    %v273 = vld [vmem:[%s0] sm:$0x3]
    %v274 = vld [vmem:[#allocation7] sm:$0xff]
    %v275 = vld [vmem:[#allocation7 + $0x8] sm:$0xff]
    %v276 = vld [vmem:[#allocation7 + $0x10] sm:$0xff]
    %v277 = vld [vmem:[#allocation7 + $0x18] sm:$0xff]
    %v279 = vsel %vm91, %v273, 0
    %281 = vmatprep.subr.mxu0 0.0
    %282 = vmatpush1.msra.mxu0 %v274
    %283 = vmatprep.subr.mxu0 0.0
    %284 = vmatpush1.msra.mxu0 %v275
    %285 = vmatprep.subr.mxu0 0.0
    %286 = vmatpush1.msra.mxu0 %v276
    %287 = vmatprep.subr.mxu0 0.0
    %288 = vmatpush1.msra.mxu0 %v277
    %289 = vmatprep.subr.mxu0 0.0
    %290 = vmatpush1.msra.mxu0 0.0
    %291 = vmatprep.subr.mxu0 0.0
    %292 = vmatpush1.msra.mxu0 0.0
    %293 = vmatprep.subr.mxu0 0.0
    %294 = vmatpush1.msra.mxu0 0.0
    %295 = vmatprep.subr.mxu0 0.0
    %296 = vmatpush1.msra.mxu0 0.0
    %297 = vmatprep.subr.mxu0 0.0
    %298 = vmatpush1.msra.mxu0 0.0
    %299 = vmatprep.subr.mxu0 0.0
    %300 = vmatpush1.msra.mxu0 0.0
    %301 = vmatprep.subr.mxu0 0.0
    %302 = vmatpush1.msra.mxu0 0.0
    %303 = vmatprep.subr.mxu0 0.0
    %304 = vmatpush1.msra.mxu0 0.0
    %305 = vmatprep.subr.mxu0 0.0
    %306 = vmatpush1.msra.mxu0 0.0
    %307 = vmatprep.subr.mxu0 0.0
    %308 = vmatpush1.msra.mxu0 0.0
    %309 = vmatprep.subr.mxu0 0.0
    %310 = vmatpush1.msra.mxu0 0.0
    %311 = vmatprep.subr.mxu0 0.0
    %312 = vmatpush1.msra.mxu0 0.0
    %313 = vmatprep.subr.mxu0 0.0
    %314 = vmatpush1.msra.mxu0 0.0
    %315 = vmatprep.subr.mxu0 0.0
    %316 = vmatpush1.msra.mxu0 0.0
    %317 = vmatprep.subr.mxu0 0.0
    %318 = vmatpush1.msra.mxu0 0.0
    %319 = vmatprep.subr.mxu0 0.0
    %320 = vmatpush1.msra.mxu0 0.0
    %321 = vmatprep.subr.mxu0 0.0
    %322 = vmatpush1.msra.mxu0 0.0
    %323 = vmatprep.subr.mxu0 0.0
    %324 = vmatpush1.msra.mxu0 0.0
    %325 = vmatprep.subr.mxu0 0.0
    %326 = vmatpush1.msra.mxu0 0.0
    %327 = vmatprep.subr.mxu0 0.0
    %328 = vmatpush1.msra.mxu0 0.0
    %329 = vmatprep.subr.mxu0 0.0
    %330 = vmatpush1.msra.mxu0 0.0
    %331 = vmatprep.subr.mxu0 0.0
    %332 = vmatpush1.msra.mxu0 0.0
    %333 = vmatprep.subr.mxu0 0.0
    %334 = vmatpush1.msra.mxu0 0.0
    %335 = vmatprep.subr.mxu0 0.0
    %336 = vmatpush1.msra.mxu0 0.0
    %337 = vmatprep.subr.mxu0 0.0
    %338 = vmatpush1.msra.mxu0 0.0
    %339 = vmatprep.subr.mxu0 0.0
    %340 = vmatpush1.msra.mxu0 0.0
    %341 = vmatprep.subr.mxu0 0.0
    %342 = vmatpush1.msra.mxu0 0.0
    %343 = vmatprep.subr.mxu0 0.0
    %344 = vmatpush1.msra.mxu0 0.0
    %345 = vmatprep.mubr.f32.mxu0 0.0
    %346 = vmatmul.mubr.f32.gmra.mrb[0].mxu0 %v279
    %v347 = vpop.f32.mrb[0].mxu0
    %v348 = vadd.f32 0.0, %v347
    %v349 = vpop.f32.mrb[0].mxu0
    %350 = vdwg.mxu0
    %v353 = vunpack.c.l.s4 1966171168
    %v354 = vunpack.c.0.s8 %v353
    %v355 = vlaneseq
    %v356 = vshrl.u32 %v355, 7
    %v357 = vsub.s32 %v354, %v356
    %v358 = vrot.slane %v348, %v357
    %v359 = vcombine.high %v358, %v358
    %v361 = vunpack.c.l.s4 1966171168
    %v362 = vunpack.c.0.s8 %v361
    %v363 = vlaneseq
    %v364 = vshrl.u32 %v363, 7
    %v365 = vsub.s32 %v362, %v364
    %v366 = vrot.slane %v358, %v365
    %v368 = vunpack.c.l.s4 1966171168
    %v369 = vunpack.c.0.s8 %v368
    %v370 = vlaneseq
    %v371 = vshrl.u32 %v370, 7
    %v372 = vsub.s32 %v369, %v371
    %v373 = vrot.slane %v359, %v372
    %v374 = vlaneseq
    %v375 = vshrl.u32 %v374, 7
    %v376 = vsub.s32 0, %v375
    %v377 = vrot.slane %v366, %v376
    %v378 = vlaneseq
    %v379 = vshrl.u32 %v378, 7
    %v380 = vsub.s32 0, %v379
    %v381 = vrot.slane %v373, %v380
    %v384 = vmul.f32 %v165, %v377
    %v385 = vmul.f32 %v170, %v381
    %v387 = vsel %vm91, %v384, 0
    %v390 = vsel %vm91, %v385, 0
    %392 = vmatprep.subr.mxu0 0.0
    %393 = vmatpush1.msra.mxu0 %v252
    %394 = vmatprep.subr.mxu0 0.0
    %395 = vmatpush1.msra.mxu0 %v253
    %396 = vmatprep.subr.mxu0 0.0
    %397 = vmatpush1.msra.mxu0 %v254
    %398 = vmatprep.subr.mxu0 0.0
    %399 = vmatpush1.msra.mxu0 %v255
    %400 = vmatprep.subr.mxu0 0.0
    %401 = vmatpush1.msra.mxu0 0.0
    %402 = vmatprep.subr.mxu0 0.0
    %403 = vmatpush1.msra.mxu0 0.0
    %404 = vmatprep.subr.mxu0 0.0
    %405 = vmatpush1.msra.mxu0 0.0
    %406 = vmatprep.subr.mxu0 0.0
    %407 = vmatpush1.msra.mxu0 0.0
    %408 = vmatprep.subr.mxu0 0.0
    %409 = vmatpush1.msra.mxu0 0.0
    %410 = vmatprep.subr.mxu0 0.0
    %411 = vmatpush1.msra.mxu0 0.0
    %412 = vmatprep.subr.mxu0 0.0
    %413 = vmatpush1.msra.mxu0 0.0
    %414 = vmatprep.subr.mxu0 0.0
    %415 = vmatpush1.msra.mxu0 0.0
    %416 = vmatprep.subr.mxu0 0.0
    %417 = vmatpush1.msra.mxu0 0.0
    %418 = vmatprep.subr.mxu0 0.0
    %419 = vmatpush1.msra.mxu0 0.0
    %420 = vmatprep.subr.mxu0 0.0
    %421 = vmatpush1.msra.mxu0 0.0
    %422 = vmatprep.subr.mxu0 0.0
    %423 = vmatpush1.msra.mxu0 0.0
    %424 = vmatprep.subr.mxu0 0.0
    %425 = vmatpush1.msra.mxu0 0.0
    %426 = vmatprep.subr.mxu0 0.0
    %427 = vmatpush1.msra.mxu0 0.0
    %428 = vmatprep.subr.mxu0 0.0
    %429 = vmatpush1.msra.mxu0 0.0
    %430 = vmatprep.subr.mxu0 0.0
    %431 = vmatpush1.msra.mxu0 0.0
    %432 = vmatprep.subr.mxu0 0.0
    %433 = vmatpush1.msra.mxu0 0.0
    %434 = vmatprep.subr.mxu0 0.0
    %435 = vmatpush1.msra.mxu0 0.0
    %436 = vmatprep.subr.mxu0 0.0
    %437 = vmatpush1.msra.mxu0 0.0
    %438 = vmatprep.subr.mxu0 0.0
    %439 = vmatpush1.msra.mxu0 0.0
    %440 = vmatprep.subr.mxu0 0.0
    %441 = vmatpush1.msra.mxu0 0.0
    %442 = vmatprep.subr.mxu0 0.0
    %443 = vmatpush1.msra.mxu0 0.0
    %444 = vmatprep.subr.mxu0 0.0
    %445 = vmatpush1.msra.mxu0 0.0
    %446 = vmatprep.subr.mxu0 0.0
    %447 = vmatpush1.msra.mxu0 0.0
    %448 = vmatprep.subr.mxu0 0.0
    %449 = vmatpush1.msra.mxu0 0.0
    %450 = vmatprep.subr.mxu0 0.0
    %451 = vmatpush1.msra.mxu0 0.0
    %452 = vmatprep.subr.mxu0 0.0
    %453 = vmatpush1.msra.mxu0 0.0
    %454 = vmatprep.subr.mxu0 0.0
    %455 = vmatpush1.msra.mxu0 0.0
    %456 = vmatprep.mubr.f32.mxu0 0.0
    %457 = vmatmul.mubr.f32.gmra.mrb[0].mxu0 %v387
    %v458 = vpop.f32.mrb[0].mxu0
    %v459 = vadd.f32 0.0, %v458
    %v460 = vpop.f32.mrb[0].mxu0
    %461 = vmatprep.mubr.f32.mxu0 0.0
    %462 = vmatmul.mubr.f32.gmra.mrb[0].mxu0 %v390
    %v463 = vpop.f32.mrb[0].mxu0
    %v464 = vadd.f32 0.0, %v463
    %v465 = vpop.f32.mrb[0].mxu0
    %466 = vdwg.mxu0
    %v467 = vmul.f32 %v459, 0.35355338
    %v468 = vmul.f32 %v464, 0.35355338
    %v469 = vadd.f32 %v467, %v265
    %v470 = vadd.f32 %v468, %v272
    %vm471 = vcmask 31744
    %v472 = vsel %vm471, %v469, -inf
    %v473 = vrot.slane %v472, 4
    %v474 = vmax.f32 %v472, %v473
    %v475 = vrot.slane %v474, 2
    %v476 = vmax.f32 %v474, %v475
    %v477 = vrot.slane %v476, 1
    %v478 = vmax.f32 %v476, %v477
    %v479 = vsel %vm471, %v470, -inf
    %v480 = vrot.slane %v479, 4
    %v481 = vmax.f32 %v479, %v480
    %v482 = vrot.slane %v481, 2
    %v483 = vmax.f32 %v481, %v482
    %v484 = vrot.slane %v483, 1
    %v485 = vmax.f32 %v483, %v484
    %v486 = vsub.f32 %v469, %v478
    %v487 = vsub.f32 %v470, %v485
    %v488 = vmul.f32 %v486, 1.442695
    %v489 = vpow.pop %v488
    %v490 = vmul.f32 %v487, 1.442695
    %v491 = vpow.pop %v490
    %v492 = vsel %vm471, %v489, 0.0
    %v493 = vrot.slane %v492, 4
    %v494 = vadd.f32 %v492, %v493
    %v495 = vrot.slane %v494, 2
    %v496 = vadd.f32 %v494, %v495
    %v497 = vrot.slane %v496, 1
    %v498 = vadd.f32 %v496, %v497
    %v499 = vsel %vm471, %v491, 0.0
    %v500 = vrot.slane %v499, 4
    %v501 = vadd.f32 %v499, %v500
    %v502 = vrot.slane %v501, 2
    %v503 = vadd.f32 %v501, %v502
    %v504 = vrot.slane %v503, 1
    %v505 = vadd.f32 %v503, %v504
    %v506 = vrcp.pop %v498
    %v507 = vrcp.pop %v505
    %v508 = vmul.f32 %v489, %v506
    %v509 = vmul.f32 %v491, %v507
    %v511 = vsel %vm471, %v508, 0
    %v514 = vsel %vm471, %v509, 0
    %v517 = vsel %vm471, %v252, 0
    %v520 = vsel %vm471, %v253, 0
    %v523 = vsel %vm471, %v254, 0
    %v526 = vsel %vm471, %v255, 0
    %528 = vmatprep.subr.mxu0 0.0
    %529 = vmatpush1.xpose.msra.mxu0 %v517
    %530 = vmatprep.subr.mxu0 0.0
    %531 = vmatpush1.xpose.msra.mxu0 %v520
    %532 = vmatprep.subr.mxu0 0.0
    %533 = vmatpush1.xpose.msra.mxu0 %v523
    %534 = vmatprep.subr.mxu0 0.0
    %535 = vmatpush1.xpose.msra.mxu0 %v526
    %536 = vmatprep.subr.mxu0 0.0
    %537 = vmatpush1.xpose.msra.mxu0 0.0
    %538 = vmatprep.subr.mxu0 0.0
    %539 = vmatpush1.xpose.msra.mxu0 0.0
    %540 = vmatprep.subr.mxu0 0.0
    %541 = vmatpush1.xpose.msra.mxu0 0.0
    %542 = vmatprep.subr.mxu0 0.0
    %543 = vmatpush1.xpose.msra.mxu0 0.0
    %544 = vmatprep.subr.mxu0 0.0
    %545 = vmatpush1.xpose.msra.mxu0 0.0
    %546 = vmatprep.subr.mxu0 0.0
    %547 = vmatpush1.xpose.msra.mxu0 0.0
    %548 = vmatprep.subr.mxu0 0.0
    %549 = vmatpush1.xpose.msra.mxu0 0.0
    %550 = vmatprep.subr.mxu0 0.0
    %551 = vmatpush1.xpose.msra.mxu0 0.0
    %552 = vmatprep.subr.mxu0 0.0
    %553 = vmatpush1.xpose.msra.mxu0 0.0
    %554 = vmatprep.subr.mxu0 0.0
    %555 = vmatpush1.xpose.msra.mxu0 0.0
    %556 = vmatprep.subr.mxu0 0.0
    %557 = vmatpush1.xpose.msra.mxu0 0.0
    %558 = vmatprep.subr.mxu0 0.0
    %559 = vmatpush1.xpose.msra.mxu0 0.0
    %560 = vmatprep.subr.mxu0 0.0
    %561 = vmatpush1.xpose.msra.mxu0 0.0
    %562 = vmatprep.subr.mxu0 0.0
    %563 = vmatpush1.xpose.msra.mxu0 0.0
    %564 = vmatprep.subr.mxu0 0.0
    %565 = vmatpush1.xpose.msra.mxu0 0.0
    %566 = vmatprep.subr.mxu0 0.0
    %567 = vmatpush1.xpose.msra.mxu0 0.0
    %568 = vmatprep.subr.mxu0 0.0
    %569 = vmatpush1.xpose.msra.mxu0 0.0
    %570 = vmatprep.subr.mxu0 0.0
    %571 = vmatpush1.xpose.msra.mxu0 0.0
    %572 = vmatprep.subr.mxu0 0.0
    %573 = vmatpush1.xpose.msra.mxu0 0.0
    %574 = vmatprep.subr.mxu0 0.0
    %575 = vmatpush1.xpose.msra.mxu0 0.0
    %576 = vmatprep.subr.mxu0 0.0
    %577 = vmatpush1.xpose.msra.mxu0 0.0
    %578 = vmatprep.subr.mxu0 0.0
    %579 = vmatpush1.xpose.msra.mxu0 0.0
    %580 = vmatprep.subr.mxu0 0.0
    %581 = vmatpush1.xpose.msra.mxu0 0.0
    %582 = vmatprep.subr.mxu0 0.0
    %583 = vmatpush1.xpose.msra.mxu0 0.0
    %584 = vmatprep.subr.mxu0 0.0
    %585 = vmatpush1.xpose.msra.mxu0 0.0
    %586 = vmatprep.subr.mxu0 0.0
    %587 = vmatpush1.xpose.msra.mxu0 0.0
    %588 = vmatprep.subr.mxu0 0.0
    %589 = vmatpush1.xpose.msra.mxu0 0.0
    %590 = vmatprep.subr.mxu0 0.0
    %591 = vmatpush1.xpose.msra.mxu0 0.0
    %592 = vmatprep.mubr.f32.mxu0 0.0
    %593 = vmatmul.mubr.f32.gmra.mrb[0].mxu0 %v511
    %v594 = vpop.f32.mrb[0].mxu0
    %v595 = vadd.f32 0.0, %v594
    %v596 = vpop.f32.mrb[0].mxu0
    %597 = vmatprep.mubr.f32.mxu0 0.0
    %598 = vmatmul.mubr.f32.gmra.mrb[0].mxu0 %v514
    %v599 = vpop.f32.mrb[0].mxu0
    %v600 = vadd.f32 0.0, %v599
    %v601 = vpop.f32.mrb[0].mxu0
    %602 = vdwg.mxu0
    %v603 = vmul.f32 %v595, %v244
    %v604 = vmul.f32 %v600, %v249
    %v605 = vsel %vm91, %v603, 0.0
    %v606 = vrot.slane %v605, 4
    %v607 = vadd.f32 %v605, %v606
    %v608 = vrot.slane %v607, 2
    %v609 = vadd.f32 %v607, %v608
    %v610 = vrot.slane %v609, 1
    %v611 = vadd.f32 %v609, %v610
    %v612 = vsel %vm91, %v604, 0.0
    %v613 = vrot.slane %v612, 4
    %v614 = vadd.f32 %v612, %v613
    %v615 = vrot.slane %v614, 2
    %v616 = vadd.f32 %v614, %v615
    %v617 = vrot.slane %v616, 1
    %v618 = vadd.f32 %v616, %v617
    %v619 = vld [vmem:[#allocation8] sm:$0xff]
    %v620 = vld [vmem:[#allocation8 + $0x8] sm:$0xff]
    %v621 = vld [vmem:[#allocation8 + $0x10] sm:$0xff]
    %v622 = vld [vmem:[#allocation8 + $0x18] sm:$0xff]
    %vm625 = vcmask 1041409
    %v626 = vsel %vm625, %v618, %v611
    %v627 = vsel %vm91, %v626, 0
    %629 = vmatprep.subr.mxu0 0.0
    %630 = vmatpush1.msra.mxu0 %v619
    %631 = vmatprep.subr.mxu0 0.0
    %632 = vmatpush1.msra.mxu0 %v620
    %633 = vmatprep.subr.mxu0 0.0
    %634 = vmatpush1.msra.mxu0 %v621
    %635 = vmatprep.subr.mxu0 0.0
    %636 = vmatpush1.msra.mxu0 %v622
    %637 = vmatprep.subr.mxu0 0.0
    %638 = vmatpush1.msra.mxu0 0.0
    %639 = vmatprep.subr.mxu0 0.0
    %640 = vmatpush1.msra.mxu0 0.0
    %641 = vmatprep.subr.mxu0 0.0
    %642 = vmatpush1.msra.mxu0 0.0
    %643 = vmatprep.subr.mxu0 0.0
    %644 = vmatpush1.msra.mxu0 0.0
    %645 = vmatprep.subr.mxu0 0.0
    %646 = vmatpush1.msra.mxu0 0.0
    %647 = vmatprep.subr.mxu0 0.0
    %648 = vmatpush1.msra.mxu0 0.0
    %649 = vmatprep.subr.mxu0 0.0
    %650 = vmatpush1.msra.mxu0 0.0
    %651 = vmatprep.subr.mxu0 0.0
    %652 = vmatpush1.msra.mxu0 0.0
    %653 = vmatprep.subr.mxu0 0.0
    %654 = vmatpush1.msra.mxu0 0.0
    %655 = vmatprep.subr.mxu0 0.0
    %656 = vmatpush1.msra.mxu0 0.0
    %657 = vmatprep.subr.mxu0 0.0
    %658 = vmatpush1.msra.mxu0 0.0
    %659 = vmatprep.subr.mxu0 0.0
    %660 = vmatpush1.msra.mxu0 0.0
    %661 = vmatprep.subr.mxu0 0.0
    %662 = vmatpush1.msra.mxu0 0.0
    %663 = vmatprep.subr.mxu0 0.0
    %664 = vmatpush1.msra.mxu0 0.0
    %665 = vmatprep.subr.mxu0 0.0
    %666 = vmatpush1.msra.mxu0 0.0
    %667 = vmatprep.subr.mxu0 0.0
    %668 = vmatpush1.msra.mxu0 0.0
    %669 = vmatprep.subr.mxu0 0.0
    %670 = vmatpush1.msra.mxu0 0.0
    %671 = vmatprep.subr.mxu0 0.0
    %672 = vmatpush1.msra.mxu0 0.0
    %673 = vmatprep.subr.mxu0 0.0
    %674 = vmatpush1.msra.mxu0 0.0
    %675 = vmatprep.subr.mxu0 0.0
    %676 = vmatpush1.msra.mxu0 0.0
    %677 = vmatprep.subr.mxu0 0.0
    %678 = vmatpush1.msra.mxu0 0.0
    %679 = vmatprep.subr.mxu0 0.0
    %680 = vmatpush1.msra.mxu0 0.0
    %681 = vmatprep.subr.mxu0 0.0
    %682 = vmatpush1.msra.mxu0 0.0
    %683 = vmatprep.subr.mxu0 0.0
    %684 = vmatpush1.msra.mxu0 0.0
    %685 = vmatprep.subr.mxu0 0.0
    %686 = vmatpush1.msra.mxu0 0.0
    %687 = vmatprep.subr.mxu0 0.0
    %688 = vmatpush1.msra.mxu0 0.0
    %689 = vmatprep.subr.mxu0 0.0
    %690 = vmatpush1.msra.mxu0 0.0
    %691 = vmatprep.subr.mxu0 0.0
    %692 = vmatpush1.msra.mxu0 0.0
    %693 = vmatprep.mubr.f32.mxu0 0.0
    %694 = vmatmul.mubr.f32.gmra.mrb[0].mxu0 %v627
    %v695 = vpop.f32.mrb[0].mxu0
    %v696 = vadd.f32 0.0, %v695
    %v697 = vpop.f32.mrb[0].mxu0
    %698 = vdwg.mxu0
    %v699 = vadd.f32 %v273, %v696
    %s700 = scalar_lea.vmem [#allocation7], 32
    %v701 = vld [vmem:[%s700] sm:$0xff]
    %v702 = vld [vmem:[%s700 + $0x8] sm:$0xff]
    %v703 = vld [vmem:[%s700 + $0x10] sm:$0xff]
    %v704 = vld [vmem:[%s700 + $0x18] sm:$0xff]
    %v706 = vsel %vm91, %v699, 0
    %708 = vmatprep.subr.mxu0 0.0
    %709 = vmatpush1.msra.mxu0 %v701
    %710 = vmatprep.subr.mxu0 0.0
    %711 = vmatpush1.msra.mxu0 %v702
    %712 = vmatprep.subr.mxu0 0.0
    %713 = vmatpush1.msra.mxu0 %v703
    %714 = vmatprep.subr.mxu0 0.0
    %715 = vmatpush1.msra.mxu0 %v704
    %716 = vmatprep.subr.mxu0 0.0
    %717 = vmatpush1.msra.mxu0 0.0
    %718 = vmatprep.subr.mxu0 0.0
    %719 = vmatpush1.msra.mxu0 0.0
    %720 = vmatprep.subr.mxu0 0.0
    %721 = vmatpush1.msra.mxu0 0.0
    %722 = vmatprep.subr.mxu0 0.0
    %723 = vmatpush1.msra.mxu0 0.0
    %724 = vmatprep.subr.mxu0 0.0
    %725 = vmatpush1.msra.mxu0 0.0
    %726 = vmatprep.subr.mxu0 0.0
    %727 = vmatpush1.msra.mxu0 0.0
    %728 = vmatprep.subr.mxu0 0.0
    %729 = vmatpush1.msra.mxu0 0.0
    %730 = vmatprep.subr.mxu0 0.0
    %731 = vmatpush1.msra.mxu0 0.0
    %732 = vmatprep.subr.mxu0 0.0
    %733 = vmatpush1.msra.mxu0 0.0
    %734 = vmatprep.subr.mxu0 0.0
    %735 = vmatpush1.msra.mxu0 0.0
    %736 = vmatprep.subr.mxu0 0.0
    %737 = vmatpush1.msra.mxu0 0.0
    %738 = vmatprep.subr.mxu0 0.0
    %739 = vmatpush1.msra.mxu0 0.0
    %740 = vmatprep.subr.mxu0 0.0
    %741 = vmatpush1.msra.mxu0 0.0
    %742 = vmatprep.subr.mxu0 0.0
    %743 = vmatpush1.msra.mxu0 0.0
    %744 = vmatprep.subr.mxu0 0.0
    %745 = vmatpush1.msra.mxu0 0.0
    %746 = vmatprep.subr.mxu0 0.0
    %747 = vmatpush1.msra.mxu0 0.0
    %748 = vmatprep.subr.mxu0 0.0
    %749 = vmatpush1.msra.mxu0 0.0
    %750 = vmatprep.subr.mxu0 0.0
    %751 = vmatpush1.msra.mxu0 0.0
    %752 = vmatprep.subr.mxu0 0.0
    %753 = vmatpush1.msra.mxu0 0.0
    %754 = vmatprep.subr.mxu0 0.0
    %755 = vmatpush1.msra.mxu0 0.0
    %756 = vmatprep.subr.mxu0 0.0
    %757 = vmatpush1.msra.mxu0 0.0
    %758 = vmatprep.subr.mxu0 0.0
    %759 = vmatpush1.msra.mxu0 0.0
    %760 = vmatprep.subr.mxu0 0.0
    %761 = vmatpush1.msra.mxu0 0.0
    %762 = vmatprep.subr.mxu0 0.0
    %763 = vmatpush1.msra.mxu0 0.0
    %764 = vmatprep.subr.mxu0 0.0
    %765 = vmatpush1.msra.mxu0 0.0
    %766 = vmatprep.subr.mxu0 0.0
    %767 = vmatpush1.msra.mxu0 0.0
    %768 = vmatprep.subr.mxu0 0.0
    %769 = vmatpush1.msra.mxu0 0.0
    %770 = vmatprep.subr.mxu0 0.0
    %771 = vmatpush1.msra.mxu0 0.0
    %772 = vmatprep.mubr.f32.mxu0 0.0
    %773 = vmatmul.mubr.f32.gmra.mrb[0].mxu0 %v706
    %v774 = vpop.f32.mrb[0].mxu0
    %v775 = vadd.f32 0.0, %v774
    %v776 = vpop.f32.mrb[0].mxu0
    %777 = vdwg.mxu0
    %v780 = vunpack.c.l.s4 1966171168
    %v781 = vunpack.c.0.s8 %v780
    %v782 = vlaneseq
    %v783 = vshrl.u32 %v782, 7
    %v784 = vsub.s32 %v781, %v783
    %v785 = vrot.slane %v775, %v784
    %v786 = vcombine.high %v785, %v785
    %v788 = vunpack.c.l.s4 1966171168
    %v789 = vunpack.c.0.s8 %v788
    %v790 = vlaneseq
    %v791 = vshrl.u32 %v790, 7
    %v792 = vsub.s32 %v789, %v791
    %v793 = vrot.slane %v785, %v792
    %v795 = vunpack.c.l.s4 1966171168
    %v796 = vunpack.c.0.s8 %v795
    %v797 = vlaneseq
    %v798 = vshrl.u32 %v797, 7
    %v799 = vsub.s32 %v796, %v798
    %v800 = vrot.slane %v786, %v799
    %v801 = vlaneseq
    %v802 = vshrl.u32 %v801, 7
    %v803 = vsub.s32 0, %v802
    %v804 = vrot.slane %v793, %v803
    %v805 = vlaneseq
    %v806 = vshrl.u32 %v805, 7
    %v807 = vsub.s32 0, %v806
    %v808 = vrot.slane %v800, %v807
    %v811 = vmul.f32 %v165, %v804
    %v812 = vmul.f32 %v170, %v808
    %v814 = vsel %vm91, %v811, 0
    %v817 = vsel %vm91, %v812, 0
    %819 = vmatprep.subr.mxu0 0.0
    %820 = vmatpush1.msra.mxu0 %v252
    %821 = vmatprep.subr.mxu0 0.0
    %822 = vmatpush1.msra.mxu0 %v253
    %823 = vmatprep.subr.mxu0 0.0
    %824 = vmatpush1.msra.mxu0 %v254
    %825 = vmatprep.subr.mxu0 0.0
    %826 = vmatpush1.msra.mxu0 %v255
    %827 = vmatprep.subr.mxu0 0.0
    %828 = vmatpush1.msra.mxu0 0.0
    %829 = vmatprep.subr.mxu0 0.0
    %830 = vmatpush1.msra.mxu0 0.0
    %831 = vmatprep.subr.mxu0 0.0
    %832 = vmatpush1.msra.mxu0 0.0
    %833 = vmatprep.subr.mxu0 0.0
    %834 = vmatpush1.msra.mxu0 0.0
    %835 = vmatprep.subr.mxu0 0.0
    %836 = vmatpush1.msra.mxu0 0.0
    %837 = vmatprep.subr.mxu0 0.0
    %838 = vmatpush1.msra.mxu0 0.0
    %839 = vmatprep.subr.mxu0 0.0
    %840 = vmatpush1.msra.mxu0 0.0
    %841 = vmatprep.subr.mxu0 0.0
    %842 = vmatpush1.msra.mxu0 0.0
    %843 = vmatprep.subr.mxu0 0.0
    %844 = vmatpush1.msra.mxu0 0.0
    %845 = vmatprep.subr.mxu0 0.0
    %846 = vmatpush1.msra.mxu0 0.0
    %847 = vmatprep.subr.mxu0 0.0
    %848 = vmatpush1.msra.mxu0 0.0
    %849 = vmatprep.subr.mxu0 0.0
    %850 = vmatpush1.msra.mxu0 0.0
    %851 = vmatprep.subr.mxu0 0.0
    %852 = vmatpush1.msra.mxu0 0.0
    %853 = vmatprep.subr.mxu0 0.0
    %854 = vmatpush1.msra.mxu0 0.0
    %855 = vmatprep.subr.mxu0 0.0
    %856 = vmatpush1.msra.mxu0 0.0
    %857 = vmatprep.subr.mxu0 0.0
    %858 = vmatpush1.msra.mxu0 0.0
    %859 = vmatprep.subr.mxu0 0.0
    %860 = vmatpush1.msra.mxu0 0.0
    %861 = vmatprep.subr.mxu0 0.0
    %862 = vmatpush1.msra.mxu0 0.0
    %863 = vmatprep.subr.mxu0 0.0
    %864 = vmatpush1.msra.mxu0 0.0
    %865 = vmatprep.subr.mxu0 0.0
    %866 = vmatpush1.msra.mxu0 0.0
    %867 = vmatprep.subr.mxu0 0.0
    %868 = vmatpush1.msra.mxu0 0.0
    %869 = vmatprep.subr.mxu0 0.0
    %870 = vmatpush1.msra.mxu0 0.0
    %871 = vmatprep.subr.mxu0 0.0
    %872 = vmatpush1.msra.mxu0 0.0
    %873 = vmatprep.subr.mxu0 0.0
    %874 = vmatpush1.msra.mxu0 0.0
    %875 = vmatprep.subr.mxu0 0.0
    %876 = vmatpush1.msra.mxu0 0.0
    %877 = vmatprep.subr.mxu0 0.0
    %878 = vmatpush1.msra.mxu0 0.0
    %879 = vmatprep.subr.mxu0 0.0
    %880 = vmatpush1.msra.mxu0 0.0
    %881 = vmatprep.subr.mxu0 0.0
    %882 = vmatpush1.msra.mxu0 0.0
    %883 = vmatprep.mubr.f32.mxu0 0.0
    %884 = vmatmul.mubr.f32.gmra.mrb[0].mxu0 %v814
    %v885 = vpop.f32.mrb[0].mxu0
    %v886 = vadd.f32 0.0, %v885
    %v887 = vpop.f32.mrb[0].mxu0
    %888 = vmatprep.mubr.f32.mxu0 0.0
    %889 = vmatmul.mubr.f32.gmra.mrb[0].mxu0 %v817
    %v890 = vpop.f32.mrb[0].mxu0
    %v891 = vadd.f32 0.0, %v890
    %v892 = vpop.f32.mrb[0].mxu0
    %893 = vdwg.mxu0
    %v894 = vmul.f32 %v886, 0.35355338
    %v895 = vmul.f32 %v891, 0.35355338
    %v896 = vadd.f32 %v894, %v265
    %v897 = vadd.f32 %v895, %v272
    %v898 = vsel %vm471, %v896, -inf
    %v899 = vrot.slane %v898, 4
    %v900 = vmax.f32 %v898, %v899
    %v901 = vrot.slane %v900, 2
    %v902 = vmax.f32 %v900, %v901
    %v903 = vrot.slane %v902, 1
    %v904 = vmax.f32 %v902, %v903
    %v905 = vsel %vm471, %v897, -inf
    %v906 = vrot.slane %v905, 4
    %v907 = vmax.f32 %v905, %v906
    %v908 = vrot.slane %v907, 2
    %v909 = vmax.f32 %v907, %v908
    %v910 = vrot.slane %v909, 1
    %v911 = vmax.f32 %v909, %v910
    %v912 = vsub.f32 %v896, %v904
    %v913 = vsub.f32 %v897, %v911
    %v914 = vmul.f32 %v912, 1.442695
    %v915 = vpow.pop %v914
    %v916 = vmul.f32 %v913, 1.442695
    %v917 = vpow.pop %v916
    %v918 = vsel %vm471, %v915, 0.0
    %v919 = vrot.slane %v918, 4
    %v920 = vadd.f32 %v918, %v919
    %v921 = vrot.slane %v920, 2
    %v922 = vadd.f32 %v920, %v921
    %v923 = vrot.slane %v922, 1
    %v924 = vadd.f32 %v922, %v923
    %v925 = vsel %vm471, %v917, 0.0
    %v926 = vrot.slane %v925, 4
    %v927 = vadd.f32 %v925, %v926
    %v928 = vrot.slane %v927, 2
    %v929 = vadd.f32 %v927, %v928
    %v930 = vrot.slane %v929, 1
    %v931 = vadd.f32 %v929, %v930
    %v932 = vrcp.pop %v924
    %v933 = vrcp.pop %v931
    %v934 = vmul.f32 %v915, %v932
    %v935 = vmul.f32 %v917, %v933
    %v937 = vsel %vm471, %v934, 0
    %v940 = vsel %vm471, %v935, 0
    %942 = vmatprep.subr.mxu0 0.0
    %943 = vmatpush1.xpose.msra.mxu0 %v517
    %944 = vmatprep.subr.mxu0 0.0
    %945 = vmatpush1.xpose.msra.mxu0 %v520
    %946 = vmatprep.subr.mxu0 0.0
    %947 = vmatpush1.xpose.msra.mxu0 %v523
    %948 = vmatprep.subr.mxu0 0.0
    %949 = vmatpush1.xpose.msra.mxu0 %v526
    %950 = vmatprep.subr.mxu0 0.0
    %951 = vmatpush1.xpose.msra.mxu0 0.0
    %952 = vmatprep.subr.mxu0 0.0
    %953 = vmatpush1.xpose.msra.mxu0 0.0
    %954 = vmatprep.subr.mxu0 0.0
    %955 = vmatpush1.xpose.msra.mxu0 0.0
    %956 = vmatprep.subr.mxu0 0.0
    %957 = vmatpush1.xpose.msra.mxu0 0.0
    %958 = vmatprep.subr.mxu0 0.0
    %959 = vmatpush1.xpose.msra.mxu0 0.0
    %960 = vmatprep.subr.mxu0 0.0
    %961 = vmatpush1.xpose.msra.mxu0 0.0
    %962 = vmatprep.subr.mxu0 0.0
    %963 = vmatpush1.xpose.msra.mxu0 0.0
    %964 = vmatprep.subr.mxu0 0.0
    %965 = vmatpush1.xpose.msra.mxu0 0.0
    %966 = vmatprep.subr.mxu0 0.0
    %967 = vmatpush1.xpose.msra.mxu0 0.0
    %968 = vmatprep.subr.mxu0 0.0
    %969 = vmatpush1.xpose.msra.mxu0 0.0
    %970 = vmatprep.subr.mxu0 0.0
    %971 = vmatpush1.xpose.msra.mxu0 0.0
    %972 = vmatprep.subr.mxu0 0.0
    %973 = vmatpush1.xpose.msra.mxu0 0.0
    %974 = vmatprep.subr.mxu0 0.0
    %975 = vmatpush1.xpose.msra.mxu0 0.0
    %976 = vmatprep.subr.mxu0 0.0
    %977 = vmatpush1.xpose.msra.mxu0 0.0
    %978 = vmatprep.subr.mxu0 0.0
    %979 = vmatpush1.xpose.msra.mxu0 0.0
    %980 = vmatprep.subr.mxu0 0.0
    %981 = vmatpush1.xpose.msra.mxu0 0.0
    %982 = vmatprep.subr.mxu0 0.0
    %983 = vmatpush1.xpose.msra.mxu0 0.0
    %984 = vmatprep.subr.mxu0 0.0
    %985 = vmatpush1.xpose.msra.mxu0 0.0
    %986 = vmatprep.subr.mxu0 0.0
    %987 = vmatpush1.xpose.msra.mxu0 0.0
    %988 = vmatprep.subr.mxu0 0.0
    %989 = vmatpush1.xpose.msra.mxu0 0.0
    %990 = vmatprep.subr.mxu0 0.0
    %991 = vmatpush1.xpose.msra.mxu0 0.0
    %992 = vmatprep.subr.mxu0 0.0
    %993 = vmatpush1.xpose.msra.mxu0 0.0
    %994 = vmatprep.subr.mxu0 0.0
    %995 = vmatpush1.xpose.msra.mxu0 0.0
    %996 = vmatprep.subr.mxu0 0.0
    %997 = vmatpush1.xpose.msra.mxu0 0.0
    %998 = vmatprep.subr.mxu0 0.0
    %999 = vmatpush1.xpose.msra.mxu0 0.0
    %1000 = vmatprep.subr.mxu0 0.0
    %1001 = vmatpush1.xpose.msra.mxu0 0.0
    %1002 = vmatprep.subr.mxu0 0.0
    %1003 = vmatpush1.xpose.msra.mxu0 0.0
    %1004 = vmatprep.subr.mxu0 0.0
    %1005 = vmatpush1.xpose.msra.mxu0 0.0
    %1006 = vmatprep.mubr.f32.mxu0 0.0
    %1007 = vmatmul.mubr.f32.gmra.mrb[0].mxu0 %v937
    %v1008 = vpop.f32.mrb[0].mxu0
    %v1009 = vadd.f32 0.0, %v1008
    %v1010 = vpop.f32.mrb[0].mxu0
    %1011 = vmatprep.mubr.f32.mxu0 0.0
    %1012 = vmatmul.mubr.f32.gmra.mrb[0].mxu0 %v940
    %v1013 = vpop.f32.mrb[0].mxu0
    %v1014 = vadd.f32 0.0, %v1013
    %v1015 = vpop.f32.mrb[0].mxu0
    %1016 = vdwg.mxu0
    %v1017 = vmul.f32 %v1009, %v244
    %v1018 = vmul.f32 %v1014, %v249
    %v1019 = vsel %vm91, %v1017, 0.0
    %v1020 = vrot.slane %v1019, 4
    %v1021 = vadd.f32 %v1019, %v1020
    %v1022 = vrot.slane %v1021, 2
    %v1023 = vadd.f32 %v1021, %v1022
    %v1024 = vrot.slane %v1023, 1
    %v1025 = vadd.f32 %v1023, %v1024
    %v1026 = vsel %vm91, %v1018, 0.0
    %v1027 = vrot.slane %v1026, 4
    %v1028 = vadd.f32 %v1026, %v1027
    %v1029 = vrot.slane %v1028, 2
    %v1030 = vadd.f32 %v1028, %v1029
    %v1031 = vrot.slane %v1030, 1
    %v1032 = vadd.f32 %v1030, %v1031
    %s1033 = scalar_lea.vmem [#allocation8], 32
    %v1034 = vld [vmem:[%s1033] sm:$0xff]
    %v1035 = vld [vmem:[%s1033 + $0x8] sm:$0xff]
    %v1036 = vld [vmem:[%s1033 + $0x10] sm:$0xff]
    %v1037 = vld [vmem:[%s1033 + $0x18] sm:$0xff]
    %v1040 = vsel %vm625, %v1032, %v1025
    %v1041 = vsel %vm91, %v1040, 0
    %1043 = vmatprep.subr.mxu0 0.0
    %1044 = vmatpush1.msra.mxu0 %v1034
    %1045 = vmatprep.subr.mxu0 0.0
    %1046 = vmatpush1.msra.mxu0 %v1035
    %1047 = vmatprep.subr.mxu0 0.0
    %1048 = vmatpush1.msra.mxu0 %v1036
    %1049 = vmatprep.subr.mxu0 0.0
    %1050 = vmatpush1.msra.mxu0 %v1037
    %1051 = vmatprep.subr.mxu0 0.0
    %1052 = vmatpush1.msra.mxu0 0.0
    %1053 = vmatprep.subr.mxu0 0.0
    %1054 = vmatpush1.msra.mxu0 0.0
    %1055 = vmatprep.subr.mxu0 0.0
    %1056 = vmatpush1.msra.mxu0 0.0
    %1057 = vmatprep.subr.mxu0 0.0
    %1058 = vmatpush1.msra.mxu0 0.0
    %1059 = vmatprep.subr.mxu0 0.0
    %1060 = vmatpush1.msra.mxu0 0.0
    %1061 = vmatprep.subr.mxu0 0.0
    %1062 = vmatpush1.msra.mxu0 0.0
    %1063 = vmatprep.subr.mxu0 0.0
    %1064 = vmatpush1.msra.mxu0 0.0
    %1065 = vmatprep.subr.mxu0 0.0
    %1066 = vmatpush1.msra.mxu0 0.0
    %1067 = vmatprep.subr.mxu0 0.0
    %1068 = vmatpush1.msra.mxu0 0.0
    %1069 = vmatprep.subr.mxu0 0.0
    %1070 = vmatpush1.msra.mxu0 0.0
    %1071 = vmatprep.subr.mxu0 0.0
    %1072 = vmatpush1.msra.mxu0 0.0
    %1073 = vmatprep.subr.mxu0 0.0
    %1074 = vmatpush1.msra.mxu0 0.0
    %1075 = vmatprep.subr.mxu0 0.0
    %1076 = vmatpush1.msra.mxu0 0.0
    %1077 = vmatprep.subr.mxu0 0.0
    %1078 = vmatpush1.msra.mxu0 0.0
    %1079 = vmatprep.subr.mxu0 0.0
    %1080 = vmatpush1.msra.mxu0 0.0
    %1081 = vmatprep.subr.mxu0 0.0
    %1082 = vmatpush1.msra.mxu0 0.0
    %1083 = vmatprep.subr.mxu0 0.0
    %1084 = vmatpush1.msra.mxu0 0.0
    %1085 = vmatprep.subr.mxu0 0.0
    %1086 = vmatpush1.msra.mxu0 0.0
    %1087 = vmatprep.subr.mxu0 0.0
    %1088 = vmatpush1.msra.mxu0 0.0
    %1089 = vmatprep.subr.mxu0 0.0
    %1090 = vmatpush1.msra.mxu0 0.0
    %1091 = vmatprep.subr.mxu0 0.0
    %1092 = vmatpush1.msra.mxu0 0.0
    %1093 = vmatprep.subr.mxu0 0.0
    %1094 = vmatpush1.msra.mxu0 0.0
    %1095 = vmatprep.subr.mxu0 0.0
    %1096 = vmatpush1.msra.mxu0 0.0
    %1097 = vmatprep.subr.mxu0 0.0
    %1098 = vmatpush1.msra.mxu0 0.0
    %1099 = vmatprep.subr.mxu0 0.0
    %1100 = vmatpush1.msra.mxu0 0.0
    %1101 = vmatprep.subr.mxu0 0.0
    %1102 = vmatpush1.msra.mxu0 0.0
    %1103 = vmatprep.subr.mxu0 0.0
    %1104 = vmatpush1.msra.mxu0 0.0
    %1105 = vmatprep.subr.mxu0 0.0
    %1106 = vmatpush1.msra.mxu0 0.0
    %1107 = vmatprep.mubr.f32.mxu0 0.0
    %1108 = vmatmul.mubr.f32.gmra.mrb[0].mxu0 %v1041
    %v1109 = vpop.f32.mrb[0].mxu0
    %v1110 = vadd.f32 0.0, %v1109
    %v1111 = vpop.f32.mrb[0].mxu0
    %1112 = vdwg.mxu0
    %v1113 = vadd.f32 %v699, %v1110
    %vm1114 = vcmask 254976
    %1115 = vst.msk [vmem:[#allocation10] sm:$0x3] %vm1114, %v1113
    // Predicated region
    $region50: #{tpu_custom_call.1} parent=1 // pred_check
      _
    $region51: #{tpu_custom_call.1} parent=1 // pred_check_branch
      %1117 = sbr.rel (0) target = $region53
    $region52: #{tpu_custom_call.1} parent=1 // pred_region
      %s1119 = ssub.s32 32, 32
      %1120 = vsyncadd [#allocation4], %s1119
      %s1122 = sshll.u32 [#allocation10], 4
      %s1123 = int_to_ptr.vmem [resolvable:$true] %s1122
      %1125 = dma.vmem_to_hbm [thread:$0]  %s1123, 32, %s8, [#allocation4]
    $region53: #{tpu_custom_call.1} parent=1 // pred_fallthru
      _
    // Predicated region
    $region54: #{tpu_custom_call.1} parent=1 // pred_check
      _
    $region55: #{tpu_custom_call.1} parent=1 // pred_check_branch
      %1127 = sbr.rel (0) target = $region57
    $region56: #{tpu_custom_call.1} parent=1 // pred_region
      %1128 = dma.done [#allocation4], 32
    $region57: #{tpu_custom_call.1} parent=1 // pred_fallthru
      _
    %1129 = vsyncpa [#allocation3], 1
    %1130 = vsyncpa [#allocation6], 1
    %1131 = vsyncpa [#allocation9], 1
    %1132 = vsyncpa [#allocation4], 1

</llo_original>
